<compile_context>
chip_gen: v6e
topology: v6e:2x2x1
jax: 0.10.0
libtpu: 0.0.40
codegen_flags: <defaults>
</compile_context>

<pallas_src>
import functools

import jax
import jax.numpy as jnp
from jax import lax
from jax.experimental import pallas as pl
from jax.experimental.pallas import tpu as pltpu


def _mask_pool_kernel(x_ref, m_ref, o_ref, acc_ref, den_ref, *, compute_dtype):
    """One (batch b, spatial-tile n) grid step.

    x_ref  : [C,  Nt]  x tile, native channel-major layout
    m_ref  : [Qp, Nt]  mask tile
    o_ref  : [Qp, C]   output tile (resident across the n sweep)
    acc_ref: [Qp, C]   f32 pooled accumulator (scratch)
    den_ref: [Qp, 1]   f32 mask-area accumulator (scratch)
    """
    n = pl.program_id(1)

    @pl.when(n == 0)
    def _init():
        acc_ref[...] = jnp.zeros_like(acc_ref)
        den_ref[...] = jnp.zeros_like(den_ref)

    m_pos = m_ref[...] > 0                                  # [Qp, Nt] bool (VPU)
    m_bin_f32 = m_pos.astype(jnp.float32)
    if jnp.dtype(compute_dtype) == jnp.dtype(jnp.float32):
        m_bin = m_bin_f32
    else:
        m_bin = m_pos.astype(compute_dtype)                 # 0/1 exact in bf16
    x_t = x_ref[...].astype(compute_dtype)                  # [C, Nt]

    # Contract N on both operands: [Qp, Nt] x [C, Nt] -> [Qp, C]  (MXU).
    acc_ref[...] += lax.dot_general(
        m_bin, x_t,
        dimension_numbers=(((1,), (1,)), ((), ())),
        preferred_element_type=jnp.float32)
    # Mask area accumulates in f32 (v5e has no bf16 VPU datapath).
    den_ref[...] += jnp.sum(m_bin_f32, axis=-1, keepdims=True)

    @pl.when(n == pl.num_programs(1) - 1)
    def _finalize():
        d = den_ref[...] + 1e-8
        inv = pl.reciprocal(d, approx=True)     # EUP slot (otherwise idle)
        inv = inv * (2.0 - d * inv)             # one Newton step -> ~f32-exact
        o_ref[...] = (acc_ref[...] * inv).astype(o_ref.dtype)


def _pick_n_tile(n_total, bytes_per_n_row, budget_bytes=8 * 1024 * 1024):
    """Largest N tile that is a multiple of 128, divides N and — double
    buffered — fits `budget_bytes`.  Falls back to the full extent, which is
    always a legal block shape."""
    if n_total % 128 != 0:
        return n_total
    max_rows = max(128, budget_bytes // (2 * bytes_per_n_row))
    if n_total <= max_rows:
        return n_total
    best = None
    t = 128
    while t <= n_total:
        if n_total % t == 0 and t <= max_rows:
            best = t
        t += 128
    return best if best is not None else n_total


def mask_pooling(x, mask, *, compute_dtype=None, n_tile=None):
    """x: [B, C, H, W], mask: [B, Q, H, W] -> [B, Q, C]."""
    B, C, H, W = x.shape
    Bm, Q, Hm, Wm = mask.shape
    assert B == Bm

    # TODO(synk): the bilinear mask resize (F.interpolate, align_corners=False)
    # stays as XLA glue; fusing it into the kernel (scalar-prefetched interp
    # indices/weights) is left for a follow-up.
    if (Hm, Wm) != (H, W):
        mask = jax.image.resize(mask, (B, Q, H, W), method="linear")

    if compute_dtype is None:
        compute_dtype = x.dtype       # pass jnp.bfloat16 for full MXU rate / half VMEM

    N = H * W
    # Free (no-copy) reshapes — x stays channel-major, no wrapper transpose.
    x_k = x.reshape(B, C, N)          # [B, C, N]
    m_k = mask.reshape(B, Q, N)       # [B, Q, N]

    # Sublane-align the query (MXU "M") dimension.
    Qp = ((Q + 7) // 8) * 8
    if Qp != Q:
        m_k = jnp.pad(m_k, ((0, 0), (0, Qp - Q), (0, 0)))

    x_isz = jnp.dtype(x.dtype).itemsize
    m_isz = jnp.dtype(m_k.dtype).itemsize
    o_isz = jnp.dtype(x.dtype).itemsize

    if n_tile is None:
        n_tile = _pick_n_tile(N, C * x_isz + Qp * m_isz)
    assert N % n_tile == 0 and (n_tile % 128 == 0 or n_tile == N)
    n_steps = N // n_tile

    # Explicit scoped-VMEM budget: double-buffered input tiles + resident output
    # + f32 scratch, with 2x headroom; capped well under v7x's 64 MiB VMEM.
    need = (2 * n_tile * (C * x_isz + Qp * m_isz)
            + 2 * Qp * C * o_isz
            + 4 * Qp * (C + 128))
    vmem_limit = int(min(48 * 2 ** 20, max(16 * 2 ** 20, 2 * need)))

    kernel = functools.partial(_mask_pool_kernel, compute_dtype=compute_dtype)

    out = pl.pallas_call(
        kernel,
        out_shape=jax.ShapeDtypeStruct((B, Qp, C), x.dtype),
        grid_spec=pltpu.PrefetchScalarGridSpec(
            num_scalar_prefetch=0,
            grid=(B, n_steps),                                    # reduction (N) axis last
            in_specs=[
                # NOTE(v7x): these two specs can take pipeline_mode=pl.Buffered(3)
                # to deepen the DMA pipeline once N is tiled.
                pl.BlockSpec((None, C, n_tile), lambda b, n: (b, 0, n)),    # x  [C, Nt]
                pl.BlockSpec((None, Qp, n_tile), lambda b, n: (b, 0, n)),   # m  [Qp, Nt]
            ],
            out_specs=pl.BlockSpec((None, Qp, C), lambda b, n: (b, 0, 0)),  # [Qp, C]
            scratch_shapes=[
                pltpu.VMEM((Qp, C), jnp.float32),   # pooled accumulator
                pltpu.VMEM((Qp, 1), jnp.float32),   # mask-area accumulator
            ],
        ),
        compiler_params=pltpu.CompilerParams(
            dimension_semantics=("parallel", "arbitrary"),
            vmem_limit_bytes=vmem_limit,
        ),
    )(x_k, m_k)

    if Qp != Q:
        out = out[:, :Q, :]
    return out


def _reference(x, mask):
    # Pure-JAX reference mirroring the PyTorch forward.
    B, C, H, W = x.shape
    if mask.shape[-2:] != (H, W):
        mask = jax.image.resize(mask, mask.shape[:2] + (H, W), method="linear")
    m = (mask > 0).astype(mask.dtype)
    denorm = m.sum(axis=(-1, -2), keepdims=True) + 1e-8
    return jnp.einsum("bchw,bqhw->bqc", x, m / denorm)


if __name__ == "__main__":
    key = jax.random.PRNGKey(0)
    kx, km, km2 = jax.random.split(key, 3)

    B, C, H, W, Q = 2, 4, 16, 16, 8
    x = jax.random.normal(kx, (B, C, H, W), dtype=jnp.float32)
    mask = jax.random.normal(km, (B, Q, H, W), dtype=jnp.float32)
    ref = _reference(x, mask)

    # 1) f32, single N tile.
    out = jax.block_until_ready(mask_pooling(x, mask))
    assert out.shape == (B, Q, C), out.shape
    assert jnp.allclose(out, ref, atol=1e-5, rtol=1e-4), "f32 mismatch"

    # 2) f32, forced multi-step N reduction (exercises the accumulator path).
    out_t = jax.block_until_ready(mask_pooling(x, mask, n_tile=128))
    assert jnp.allclose(out_t, ref, atol=1e-5, rtol=1e-4), "tiled-N mismatch"

    # 3) Q not a multiple of 8 (exercises pad + slice-back).
    Q2 = 5
    mask2 = jax.random.normal(km2, (B, Q2, H, W), dtype=jnp.float32)
    out2 = jax.block_until_ready(mask_pooling(x, mask2))
    assert out2.shape == (B, Q2, C), out2.shape
    assert jnp.allclose(out2, _reference(x, mask2), atol=1e-5, rtol=1e-4), "Q-pad mismatch"

    # 4) bf16 MXU operands (0/1 mask exact; x rounding ~0.4% relative).
    out_bf = jax.block_until_ready(mask_pooling(x, mask, compute_dtype=jnp.bfloat16))
    assert jnp.allclose(out_bf, ref, atol=3e-2, rtol=3e-2), "bf16 mismatch"

    print("KERNEL_OK")
</pallas_src>

<mosaic_0001>
module attributes {stable_mosaic.version = 11 : i64} {
  func.func @_mask_pool_kernel(%arg0: i32, %arg1: i32, %arg2: memref<1x4x256xf32, #tpu.memory_space<vmem>>, %arg3: memref<1x8x256xf32, #tpu.memory_space<vmem>>, %arg4: memref<1x8x4xf32, #tpu.memory_space<vmem>>, %arg5: memref<8x4xf32, #tpu.memory_space<vmem>>, %arg6: memref<8x1xf32, #tpu.memory_space<vmem>>) attributes {dimension_semantics = [#tpu.dimension_semantics<parallel>, #tpu.dimension_semantics<arbitrary>], iteration_bounds = array<i64: 2, 1>, scalar_prefetch = 0 : i64, scratch_operands = 2 : i64, tpu.core_type = #tpu.core_type<tc>, window_params = [{transform_indices = @transform_0, window_bounds = array<i64: 1, 4, 256>}, {transform_indices = @transform_1, window_bounds = array<i64: 1, 8, 256>}, {transform_indices = @transform_2, window_bounds = array<i64: 1, 8, 4>}]} {
    %c0_i32 = arith.constant 0 : i32
    %0 = arith.cmpi eq, %arg1, %c0_i32 : i32
    %1 = arith.extui %0 : i1 to i32
    %c0_i32_0 = arith.constant 0 : i32
    %2 = arith.cmpi ne, %1, %c0_i32_0 : i32
    scf.if %2 {
      %cst_18 = arith.constant 0.000000e+00 : f32
      %23 = vector.broadcast %cst_18 : f32 to vector<8x4xf32>
      %c0_19 = arith.constant 0 : index
      %c0_20 = arith.constant 0 : index
      %24 = vector.load %arg5[%c0_19, %c0_20] : memref<8x4xf32, #tpu.memory_space<vmem>>, vector<8x4xf32>
      tpu.vector_store %arg5[%c0_19, %c0_20], %23 {strides = array<i32>} : memref<8x4xf32, #tpu.memory_space<vmem>>, vector<8x4xf32>,
      %cst_21 = arith.constant 0.000000e+00 : f32
      %25 = vector.broadcast %cst_21 : f32 to vector<8x1xf32>
      %c0_22 = arith.constant 0 : index
      %c0_23 = arith.constant 0 : index
      %26 = vector.load %arg6[%c0_22, %c0_23] : memref<8x1xf32, #tpu.memory_space<vmem>>, vector<8x1xf32>
      tpu.vector_store %arg6[%c0_22, %c0_23], %25 {strides = array<i32>} : memref<8x1xf32, #tpu.memory_space<vmem>>, vector<8x1xf32>,
    } else {
    }
    %c0 = arith.constant 0 : index
    %c0_1 = arith.constant 0 : index
    %c0_2 = arith.constant 0 : index
    %3 = vector.load %arg3[%c0, %c0_1, %c0_2] : memref<1x8x256xf32, #tpu.memory_space<vmem>>, vector<1x8x256xf32>
    %4 = vector.shape_cast %3 : vector<1x8x256xf32> to vector<8x256xf32>
    %cst = arith.constant 0.000000e+00 : f32
    %5 = vector.broadcast %cst : f32 to vector<8x256xf32>
    %6 = arith.cmpf ogt, %4, %5 : vector<8x256xf32>
    %7 = arith.extui %6 : vector<8x256xi1> to vector<8x256xi32>
    %8 = arith.sitofp %7 : vector<8x256xi32> to vector<8x256xf32>
    %c0_3 = arith.constant 0 : index
    %c0_4 = arith.constant 0 : index
    %c0_5 = arith.constant 0 : index
    %9 = vector.load %arg2[%c0_3, %c0_4, %c0_5] : memref<1x4x256xf32, #tpu.memory_space<vmem>>, vector<1x4x256xf32>
    %10 = vector.shape_cast %9 : vector<1x4x256xf32> to vector<4x256xf32>
    %c0_6 = arith.constant 0 : index
    %c0_7 = arith.constant 0 : index
    %11 = vector.load %arg5[%c0_6, %c0_7] : memref<8x4xf32, #tpu.memory_space<vmem>>, vector<8x4xf32>
    %cst_8 = arith.constant dense<0.000000e+00> : vector<8x4xf32>
    %12 = tpu.matmul %8, %10, %cst_8 {dimension_numbers = #tpu.dot_dimension_numbers<[1], [1], [0], [0], [0, 0, 1, 0], [], []>} : vector<8x256xf32>, vector<4x256xf32>, vector<8x4xf32> -> vector<8x4xf32>
    %13 = arith.addf %11, %12 : vector<8x4xf32>
    %c0_9 = arith.constant 0 : index
    %c0_10 = arith.constant 0 : index
    %14 = vector.load %arg5[%c0_9, %c0_10] : memref<8x4xf32, #tpu.memory_space<vmem>>, vector<8x4xf32>
    tpu.vector_store %arg5[%c0_9, %c0_10], %13 {strides = array<i32>} : memref<8x4xf32, #tpu.memory_space<vmem>>, vector<8x4xf32>,
    %c0_11 = arith.constant 0 : index
    %c0_12 = arith.constant 0 : index
    %15 = vector.load %arg6[%c0_11, %c0_12] : memref<8x1xf32, #tpu.memory_space<vmem>>, vector<8x1xf32>
    %cst_13 = arith.constant dense<0.000000e+00> : vector<8xf32>
    %16 = vector.multi_reduction <add>, %8, %cst_13 [1] : vector<8x256xf32> to vector<8xf32>
    %17 = vector.shape_cast %16 : vector<8xf32> to vector<8x1xf32>
    %18 = arith.addf %15, %17 : vector<8x1xf32>
    %c0_14 = arith.constant 0 : index
    %c0_15 = arith.constant 0 : index
    %19 = vector.load %arg6[%c0_14, %c0_15] : memref<8x1xf32, #tpu.memory_space<vmem>>, vector<8x1xf32>
    tpu.vector_store %arg6[%c0_14, %c0_15], %18 {strides = array<i32>} : memref<8x1xf32, #tpu.memory_space<vmem>>, vector<8x1xf32>,
    %c0_i32_16 = arith.constant 0 : i32
    %20 = arith.cmpi eq, %arg1, %c0_i32_16 : i32
    %21 = arith.extui %20 : i1 to i32
    %c0_i32_17 = arith.constant 0 : i32
    %22 = arith.cmpi ne, %21, %c0_i32_17 : i32
    scf.if %22 {
      %c0_18 = arith.constant 0 : index
      %c0_19 = arith.constant 0 : index
      %23 = vector.load %arg6[%c0_18, %c0_19] : memref<8x1xf32, #tpu.memory_space<vmem>>, vector<8x1xf32>
      %cst_20 = arith.constant 9.99999993E-9 : f32
      %24 = vector.broadcast %cst_20 : f32 to vector<8x1xf32>
      %25 = arith.addf %23, %24 : vector<8x1xf32>
      %26 = tpu.reciprocal %25 {approx = true} : vector<8x1xf32> -> vector<8x1xf32>
      %27 = arith.mulf %25, %26 : vector<8x1xf32>
      %cst_21 = arith.constant 2.000000e+00 : f32
      %28 = vector.broadcast %cst_21 : f32 to vector<8x1xf32>
      %29 = arith.subf %28, %27 : vector<8x1xf32>
      %30 = arith.mulf %26, %29 : vector<8x1xf32>
      %c0_22 = arith.constant 0 : index
      %c0_23 = arith.constant 0 : index
      %31 = vector.load %arg5[%c0_22, %c0_23] : memref<8x4xf32, #tpu.memory_space<vmem>>, vector<8x4xf32>
      %32 = vector.broadcast %30 : vector<8x1xf32> to vector<8x4xf32>
      %33 = arith.mulf %31, %32 : vector<8x4xf32>
      %c0_24 = arith.constant 0 : index
      %c0_25 = arith.constant 0 : index
      %c0_26 = arith.constant 0 : index
      %34 = vector.load %arg4[%c0_24, %c0_25, %c0_26] : memref<1x8x4xf32, #tpu.memory_space<vmem>>, vector<1x8x4xf32>
      %35 = vector.shape_cast %34 : vector<1x8x4xf32> to vector<8x4xf32>
      %36 = vector.shape_cast %33 : vector<8x4xf32> to vector<1x8x4xf32>
      tpu.vector_store %arg4[%c0_24, %c0_25, %c0_26], %36 {strides = array<i32>} : memref<1x8x4xf32, #tpu.memory_space<vmem>>, vector<1x8x4xf32>,
    } else {
    }
    return
  }
  func.func @transform_0(%arg0: i32, %arg1: i32) -> (i32, i32, i32) {
    %c0_i32 = arith.constant 0 : i32
    %c0_i32_0 = arith.constant 0 : i32
    return %arg0, %c0_i32, %arg1 : i32, i32, i32
  }
  func.func @transform_1(%arg0: i32, %arg1: i32) -> (i32, i32, i32) {
    %c0_i32 = arith.constant 0 : i32
    %c0_i32_0 = arith.constant 0 : i32
    return %arg0, %c0_i32, %arg1 : i32, i32, i32
  }
  func.func @transform_2(%arg0: i32, %arg1: i32) -> (i32, i32, i32) {
    %c0_i32 = arith.constant 0 : i32
    %c0_i32_0 = arith.constant 0 : i32
    %c0_i32_1 = arith.constant 0 : i32
    return %arg0, %c0_i32, %c0_i32_0 : i32, i32, i32
  }
}

</mosaic_0001>

<llo_original>
// kernel: tpu_custom_call.1
$region0: #{tpu_custom_call.1}
  #allocation0 [shape = 'u32[]', space=smem, size = 0x4, offset = 0x4, fixed_abs, tag = 'smem constant byte address 0x4 - core index']
  #allocation1 [shape = 'u32[144,128]{1,0:T(1,128)}', space=vmem, size = 0x12000, scoped, tag = 'internal scratch']
  #allocation2 [shape = 'f32[8,4]{1,0:T(8,128)}', space=vmem, size = 0x1000, scoped, tag = 'scratch operand']
  #allocation3 [shape = 'f32[8,1]{1,0:T(8,128)}', space=vmem, size = 0x1000, scoped, tag = 'scratch operand']
  %s0 = inlined_call_operand.hbm [shape: f32[2,4,256], index: 0, kind: input, shape index: {}]
  %s1 = inlined_call_operand.hbm [shape: f32[2,8,256], index: 1, kind: input, shape index: {}]
  %s2 = inlined_call_operand.vmem [shape: f32[2,8,4], index: 2, kind: output, shape index: {}]
  %s3 = sld [smem:[#allocation0]]
  $region57: #{tpu_custom_call.1} parent=0
    _
  %s5 = ssub.s32 1, %s3
  %s6 = scalar_select 0, %s5, %s3
  $region1: #{tpu_custom_call.1} parent=0
    #allocation4 [shape = 'u8[8192]{0}', space=vmem, size = 0x2000, scoped, tag = 'input window, operand 0']
    #allocation5 [shape = 's32[2]{0}', space=sflag, size = 0x8, scoped, tag = 'scoped memory for tpu_custom_call.1']
    #allocation6 [shape = 'u8[16384]{0}', space=vmem, size = 0x4000, scoped, tag = 'input window, operand 1']
    #allocation7 [shape = 's32[2]{0}', space=sflag, size = 0x8, scoped, tag = 'scoped memory for tpu_custom_call.1']
    %7 = vsyncpa [#allocation5], 0
    %s8 = scalar_lea.sflag [#allocation5], 1
    %9 = vsyncpa %s8, 0
    %10 = vsyncpa [#allocation7], 0
    %s11 = scalar_lea.sflag [#allocation7], 1
    %12 = vsyncpa %s11, 0
    loop: start=0, step=1, limit=4
    $region2: #{tpu_custom_call.1} parent=1 // loop_pre_header
      _
    $region3: #{tpu_custom_call.1} parent=1 // loop_header
      %s14 = sphi 0, %s18
      %p15 = scmp.ge.s32.totalorder %s14, 4
      %s21 = sphi 0, %s33
      %s22 = sphi 0, %s29
      %s23 = sphi 0, %s21
      %s24 = sphi 0, %s22
      %s25 = sphi 0, %s23
      %s26 = sphi 0, %s24
      %s38 = sphi 0, %s40
      %s41 = sphi 0, %s38
      %s42 = sphi 0, %s41
      %s58 = sphi 0, %s42
      %s66 = sphi 0, %s68
      %s69 = sphi 0, %s66
      %s70 = sphi 0, %s69
      %s86 = sphi 0, %s70
      %s92 = sphi 0, %s94
      %s95 = sphi 0, %s92
      %s96 = sphi 0, %s95
      %s112 = sphi 0, %s96
    $region4: #{tpu_custom_call.1} parent=1 // loop_header_branch
      %17 = sbr.rel (%p15) target = $region8
    $region5: #{tpu_custom_call.1} parent=1 // loop_body
      %s19 = ssub.s32 %s14, 1
      %s20 = ssub.s32 %s14, 2
      %s27 = sadd.s32 1, %s22
      %p28 = scmp.ge.s32.totalorder %s27, 1
      %s29 = scalar_select %p28, 0, %s27
      %s30 = sadd.s32 1, %s21
      %s31 = scalar_select %p28, %s30, %s21
      %p32 = scmp.ge.s32.totalorder %s31, 2
      %s33 = scalar_select %p32, 0, %s31
      %s34 = ssub.s32 %s21, %s33
      %s35 = ssub.s32 %s22, %s29
      %s36 = sor.u32 %s34, %s35
      %p37 = scmp.eq.s32.totalorder %s36, 0
      %s39 = sadd.s32 %s38, 1
      %s40 = scalar_select %p37, %s38, %s39
      %p43 = pneg %p37
      %p44 = scmp.eq.s32.totalorder %s14, 1
      %p45 = por %p43, %p44
      %p46 = scmp.ne.s32.totalorder %s38, %s41
      %p47 = scmp.eq.s32.totalorder %s14, 0
      %p48 = por %p46, %p47
      %p49 = scmp.ne.s32.totalorder %s38, %s41
      %p50 = scmp.eq.s32.totalorder %s19, 1
      %p51 = por %p49, %p50
      %p52 = scmp.ne.s32.totalorder %s41, %s42
      %p53 = scmp.eq.s32.totalorder %s19, 0
      %p54 = por %p52, %p53
      %p55 = scmp.ne.s32.totalorder %s41, %s42
      %p56 = scmp.eq.s32.totalorder %s20, 1
      %p57 = por %p55, %p56
      %p59 = scmp.ne.s32.totalorder %s42, %s58
      %p60 = scmp.eq.s32.totalorder %s20, 0
      %p61 = por %p59, %p60
      %s62 = ssub.s32 %s21, %s33
      %s63 = ssub.s32 %s22, %s29
      %s64 = sor.u32 %s62, %s63
      %p65 = scmp.eq.s32.totalorder %s64, 0
      %s67 = sadd.s32 %s66, 1
      %s68 = scalar_select %p65, %s66, %s67
      %p71 = pneg %p65
      %p72 = scmp.eq.s32.totalorder %s14, 1
      %p73 = por %p71, %p72
      %p74 = scmp.ne.s32.totalorder %s66, %s69
      %p75 = scmp.eq.s32.totalorder %s14, 0
      %p76 = por %p74, %p75
      %p77 = scmp.ne.s32.totalorder %s66, %s69
      %p78 = scmp.eq.s32.totalorder %s19, 1
      %p79 = por %p77, %p78
      %p80 = scmp.ne.s32.totalorder %s69, %s70
      %p81 = scmp.eq.s32.totalorder %s19, 0
      %p82 = por %p80, %p81
      %p83 = scmp.ne.s32.totalorder %s69, %s70
      %p84 = scmp.eq.s32.totalorder %s20, 1
      %p85 = por %p83, %p84
      %p87 = scmp.ne.s32.totalorder %s70, %s86
      %p88 = scmp.eq.s32.totalorder %s20, 0
      %p89 = por %p87, %p88
      %s90 = ssub.s32 %s21, %s33
      %p91 = scmp.eq.s32.totalorder %s90, 0
      %s93 = sadd.s32 %s92, 1
      %s94 = scalar_select %p91, %s92, %s93
      %p97 = pneg %p91
      %p98 = scmp.eq.s32.totalorder %s14, 1
      %p99 = por %p97, %p98
      %p100 = scmp.ne.s32.totalorder %s92, %s95
      %p101 = scmp.eq.s32.totalorder %s14, 0
      %p102 = por %p100, %p101
      %p103 = scmp.ne.s32.totalorder %s92, %s95
      %p104 = scmp.eq.s32.totalorder %s19, 1
      %p105 = por %p103, %p104
      %p106 = scmp.ne.s32.totalorder %s95, %s96
      %p107 = scmp.eq.s32.totalorder %s19, 0
      %p108 = por %p106, %p107
      %p109 = scmp.ne.s32.totalorder %s95, %s96
      %p110 = scmp.eq.s32.totalorder %s20, 1
      %p111 = por %p109, %p110
      %p113 = scmp.ne.s32.totalorder %s96, %s112
      %p114 = scmp.eq.s32.totalorder %s20, 0
      %p115 = por %p113, %p114
      %p116 = scmp.le.s32.totalorder 1, %s14
      %p117 = scmp.lt.s32.totalorder %s14, 3
      %p118 = pnand %p116, %p117
      %p119 = pneg %p118
      // Predicated region
      $region9: #{tpu_custom_call.1} parent=5 // pred_check
        _
      $region10: #{tpu_custom_call.1} parent=5 // pred_check_branch
        %121 = sbr.rel (%p118) target = $region12
      $region11: #{tpu_custom_call.1} parent=5 // pred_region
        %s122 = ssub.s32 %s14, 1
      $region12: #{tpu_custom_call.1} parent=5 // pred_fallthru
        _
      %p123 = scmp.lt.s32.totalorder %s14, 2
      // Predicated region
      $region13: #{tpu_custom_call.1} parent=5 // pred_check
        %p124 = pneg %p123
      $region14: #{tpu_custom_call.1} parent=5 // pred_check_branch
        %126 = sbr.rel (%p124) target = $region16
      $region15: #{tpu_custom_call.1} parent=5 // pred_region
        // Predicated region
        $region17: #{tpu_custom_call.1} parent=15 // pred_check
          %p127 = pneg %p48
        $region18: #{tpu_custom_call.1} parent=15 // pred_check_branch
          %129 = sbr.rel (%p127) target = $region20
        $region19: #{tpu_custom_call.1} parent=15 // pred_region
          %s130 = sand.u32 %s38, 1
          %s131 = scalar_lea.sflag [#allocation5], %s130
          %s132 = sand.u32 %s38, 1
          %s133 = smul.addr %s132, 8
          %s134 = scalar_lea.vmem [#allocation4], %s133
          %s135 = smul.u32 2, %s22
          %s137 = ssub.s32 128, 128
          %138 = vsyncadd %s131, %s137
          %s139 = smul.addr %s21, 2
          %s140 = sadd.s32 %s135, %s139
          %s141 = smul.addr %s140, 64
          %s142 = scalar_lea.hbm %s0, %s141
          %s144 = sshll.u32 %s134, 4
          %s145 = int_to_ptr.vmem [resolvable:$true] %s144
          %147 = dma.hbm_to_vmem [thread:$0]  %s142, 128, %s145, %s131
        $region20: #{tpu_custom_call.1} parent=15 // pred_fallthru
          _
        // Predicated region
        $region21: #{tpu_custom_call.1} parent=15 // pred_check
          %p148 = pneg %p76
        $region22: #{tpu_custom_call.1} parent=15 // pred_check_branch
          %150 = sbr.rel (%p148) target = $region24
        $region23: #{tpu_custom_call.1} parent=15 // pred_region
          %s151 = sand.u32 %s66, 1
          %s152 = scalar_lea.sflag [#allocation7], %s151
          %s153 = sand.u32 %s66, 1
          %s154 = smul.addr %s153, 16
          %s155 = scalar_lea.vmem [#allocation6], %s154
          %s156 = smul.u32 2, %s22
          %s158 = ssub.s32 256, 256
          %159 = vsyncadd %s152, %s158
          %s160 = smul.addr %s21, 2
          %s161 = sadd.s32 %s156, %s160
          %s162 = smul.addr %s161, 128
          %s163 = scalar_lea.hbm %s1, %s162
          %s165 = sshll.u32 %s155, 4
          %s166 = int_to_ptr.vmem [resolvable:$true] %s165
          %168 = dma.hbm_to_vmem [thread:$0]  %s163, 256, %s166, %s152
        $region24: #{tpu_custom_call.1} parent=15 // pred_fallthru
          _
      $region16: #{tpu_custom_call.1} parent=5 // pred_fallthru
        _
      %p169 = scmp.le.s32.totalorder 1, %s14
      %p170 = scmp.lt.s32.totalorder %s14, 3
      %p171 = pnand %p169, %p170
      %p172 = pneg %p171
      // Predicated region
      $region25: #{tpu_custom_call.1} parent=5 // pred_check
        _
      $region26: #{tpu_custom_call.1} parent=5 // pred_check_branch
        %174 = sbr.rel (%p171) target = $region28
      $region27: #{tpu_custom_call.1} parent=5 // pred_region
        %s175 = ssub.s32 %s14, 1
        %s176 = sand.u32 %s41, 1
        %s177 = scalar_lea.sflag [#allocation5], %s176
        %s178 = sand.u32 %s41, 1
        %s179 = smul.addr %s178, 8
        %s180 = scalar_lea.vmem [#allocation4], %s179
        // Predicated region
        $region29: #{tpu_custom_call.1} parent=27 // pred_check
          %p181 = pneg %p54
        $region30: #{tpu_custom_call.1} parent=27 // pred_check_branch
          %183 = sbr.rel (%p181) target = $region32
        $region31: #{tpu_custom_call.1} parent=27 // pred_region
          %184 = dma.done %s177, 128
        $region32: #{tpu_custom_call.1} parent=27 // pred_fallthru
          _
        %s185 = sand.u32 %s69, 1
        %s186 = scalar_lea.sflag [#allocation7], %s185
        %s187 = sand.u32 %s69, 1
        %s188 = smul.addr %s187, 16
        %s189 = scalar_lea.vmem [#allocation6], %s188
        // Predicated region
        $region33: #{tpu_custom_call.1} parent=27 // pred_check
          %p190 = pneg %p82
        $region34: #{tpu_custom_call.1} parent=27 // pred_check_branch
          %192 = sbr.rel (%p190) target = $region36
        $region35: #{tpu_custom_call.1} parent=27 // pred_region
          %193 = dma.done %s186, 256
        $region36: #{tpu_custom_call.1} parent=27 // pred_fallthru
          _
        %s194 = sand.u32 %s41, 1
        %s195 = scalar_lea.sflag [#allocation5], %s194
        %s196 = sand.u32 %s41, 1
        %s197 = smul.addr %s196, 8
        %s198 = scalar_lea.vmem [#allocation4], %s197
        %p199 = pneg %p54
        %p200 = pneg %p51
        %s201 = sand.u32 %s69, 1
        %s202 = scalar_lea.sflag [#allocation7], %s201
        %s203 = sand.u32 %s69, 1
        %s204 = smul.addr %s203, 16
        %s205 = scalar_lea.vmem [#allocation6], %s204
        %p206 = pneg %p82
        %p207 = pneg %p79
        %p208 = pneg %p108
        %p209 = pneg %p105
        %p210 = scmp.lt.s32.totalorder %s23, 1
        %s211 = scalar_select %p210, %s23, 1
        %s212 = smul.addr %s211, 8
        %s213 = scalar_lea.vmem %s2, %s212
        %s214 = smul.u32 2, %s24
        %s215 = smul.u32 2, %s24
        %p216 = scmp.lt.s32.totalorder %s23, 1
        %s217 = scalar_select %p216, %s23, 1
        %s218 = smul.addr %s217, 8
        %s219 = scalar_lea.vmem %s2, %s218
        %p220 = scmp.eq.s32.totalorder %s24, 0
        // Predicated region
        $region37: #{tpu_custom_call.1} parent=27 // pred_check
          %p221 = pneg %p220
        $region38: #{tpu_custom_call.1} parent=27 // pred_check_branch
          %223 = sbr.rel (%p221) target = $region40
        $region39: #{tpu_custom_call.1} parent=27 // pred_region
          %vm224 = vcmask 31744
          %225 = vst.msk [vmem:[#allocation2] sm:$0xff] %vm224, 0.0
          %vm226 = vcmask 7168
          %227 = vst.msk [vmem:[#allocation3] sm:$0xff] %vm226, 0.0
        $region40: #{tpu_custom_call.1} parent=27 // pred_fallthru
          _
        %v228 = vld [vmem:[%s189] sm:$0xff]
        %v229 = vld [vmem:[%s189 + $0x8] sm:$0xff]
        %vm230 = vcmp.gt.f32.partialorder %v228, 0.0
        %vm231 = vcmp.gt.f32.partialorder %v229, 0.0
        %v232 = vsel %vm230, 1, 0
        %v233 = vsel %vm231, 1, 0
        %v234 = vcvt.s32.f32 %v232
        %v235 = vcvt.s32.f32 %v233
        %v236 = vld [vmem:[%s180] sm:$0xff]
        %v237 = vld [vmem:[#allocation2] sm:$0xff]
        %v239 = vcombine.high %v236, %v236
        %241 = vmatprep.subr.mxu0 0.0
        %242 = vmatpush1.xpose.msra.mxu0 0.0
        %243 = vmatprep.subr.mxu0 0.0
        %244 = vmatpush1.xpose.msra.mxu0 0.0
        %245 = vmatprep.subr.mxu0 0.0
        %246 = vmatpush1.xpose.msra.mxu0 0.0
        %247 = vmatprep.subr.mxu0 0.0
        %248 = vmatpush1.xpose.msra.mxu0 0.0
        %249 = vmatprep.subr.mxu0 0.0
        %250 = vmatpush1.xpose.msra.mxu0 0.0
        %251 = vmatprep.subr.mxu0 0.0
        %252 = vmatpush1.xpose.msra.mxu0 0.0
        %253 = vmatprep.subr.mxu0 0.0
        %254 = vmatpush1.xpose.msra.mxu0 0.0
        %255 = vmatprep.subr.mxu0 0.0
        %256 = vmatpush1.xpose.msra.mxu0 0.0
        %257 = vmatprep.subr.mxu0 0.0
        %258 = vmatpush1.xpose.msra.mxu0 0.0
        %259 = vmatprep.subr.mxu0 0.0
        %260 = vmatpush1.xpose.msra.mxu0 0.0
        %261 = vmatprep.subr.mxu0 0.0
        %262 = vmatpush1.xpose.msra.mxu0 0.0
        %263 = vmatprep.subr.mxu0 0.0
        %264 = vmatpush1.xpose.msra.mxu0 0.0
        %265 = vmatprep.subr.mxu0 0.0
        %266 = vmatpush1.xpose.msra.mxu0 0.0
        %267 = vmatprep.subr.mxu0 0.0
        %268 = vmatpush1.xpose.msra.mxu0 0.0
        %269 = vmatprep.subr.mxu0 0.0
        %270 = vmatpush1.xpose.msra.mxu0 0.0
        %271 = vmatprep.subr.mxu0 %v239
        %272 = vmatpush1.xpose.msra.mxu0 %v236
        %273 = vmatprep.subr.mxu0 0.0
        %274 = vmatpush2.xpose.msra.mxu0 0.0
        %275 = vmatprep.subr.mxu0 0.0
        %276 = vmatpush2.xpose.msra.mxu0 0.0
        %277 = vmatprep.subr.mxu0 0.0
        %278 = vmatpush2.xpose.msra.mxu0 0.0
        %279 = vmatprep.subr.mxu0 0.0
        %280 = vmatpush2.xpose.msra.mxu0 0.0
        %281 = vmatprep.subr.mxu0 0.0
        %282 = vmatpush2.xpose.msra.mxu0 0.0
        %283 = vmatprep.subr.mxu0 0.0
        %284 = vmatpush2.xpose.msra.mxu0 0.0
        %285 = vmatprep.subr.mxu0 0.0
        %286 = vmatpush2.xpose.msra.mxu0 0.0
        %287 = vmatprep.subr.mxu0 0.0
        %288 = vmatpush2.xpose.msra.mxu0 0.0
        %289 = vmatprep.subr.mxu0 0.0
        %290 = vmatpush2.xpose.msra.mxu0 0.0
        %291 = vmatprep.subr.mxu0 0.0
        %292 = vmatpush2.xpose.msra.mxu0 0.0
        %293 = vmatprep.subr.mxu0 0.0
        %294 = vmatpush2.xpose.msra.mxu0 0.0
        %295 = vmatprep.subr.mxu0 0.0
        %296 = vmatpush2.xpose.msra.mxu0 0.0
        %297 = vmatprep.subr.mxu0 0.0
        %298 = vmatpush2.xpose.msra.mxu0 0.0
        %299 = vmatprep.subr.mxu0 0.0
        %300 = vmatpush2.xpose.msra.mxu0 0.0
        %301 = vmatprep.subr.mxu0 0.0
        %302 = vmatpush2.xpose.msra.mxu0 0.0
        %303 = vmatprep.subr.mxu0 0.0
        %304 = vmatpush2.xpose.msra.mxu0 0.0
        %305 = vmatprep.mubr.f32.mxu0 %v235
        %306 = vmatmul.mubr.f32.gmra.mxu0 %v234
        %v307 = vpop.f32.mrf.mxu0
        %v308 = vadd.f32 0.0, %v307
        %v309 = vpop.f32.mrf.mxu0
        %310 = vdwg.mxu0
        %v311 = vadd.f32 %v237, %v308
        %vm312 = vcmask 31744
        %313 = vst.msk [vmem:[#allocation2] sm:$0xff] %vm312, %v311
        %v314 = vld [vmem:[#allocation3] sm:$0xff]
        %v315 = vadd.f32 %v234, %v235
        %316 = vadd.xlane.f32.xlu0 %v315
        %v317 = vpop.xlane.xlu0 %316
        %v318 = vadd.f32 %v314, %v317
        %vm319 = vcmask 7168
        %320 = vst.msk [vmem:[#allocation3] sm:$0xff] %vm319, %v318
        // Predicated region
        $region41: #{tpu_custom_call.1} parent=27 // pred_check
          %p321 = pneg %p220
        $region42: #{tpu_custom_call.1} parent=27 // pred_check_branch
          %323 = sbr.rel (%p321) target = $region44
        $region43: #{tpu_custom_call.1} parent=27 // pred_region
          %v324 = vld [vmem:[#allocation3] sm:$0xff]
          %v325 = vadd.f32 %v324, 1e-08
          %v326 = vrcp.pop %v325
          %v327 = vmul.f32 %v325, %v326
          %v328 = vsub.f32 2.0, %v327
          %v329 = vmul.f32 %v326, %v328
          %v330 = vld [vmem:[#allocation2] sm:$0xff]
          %332 = vset.pattern.permute.xlu0 0
          %333 = vperm.xlu0 %332, %v329
          %v334 = vpop.permute.xlu0 %333
          %v336 = vmul.f32 %v330, %v334
          %337 = vst.msk [vmem:[%s219] sm:$0xff] %vm312, %v336
        $region44: #{tpu_custom_call.1} parent=27 // pred_fallthru
          _
        %p338 = scmp.lt.s32.totalorder %s23, 1
        %s339 = scalar_select %p338, %s23, 1
        %s340 = smul.addr %s339, 8
        %s341 = scalar_lea.vmem %s2, %s340
        // Predicated region
        $region45: #{tpu_custom_call.1} parent=27 // pred_check
          %p342 = pneg %p105
        $region46: #{tpu_custom_call.1} parent=27 // pred_check_branch
          %344 = sbr.rel (%p342) target = $region48
        $region47: #{tpu_custom_call.1} parent=27 // pred_region
          _
        $region48: #{tpu_custom_call.1} parent=27 // pred_fallthru
          _
      $region28: #{tpu_custom_call.1} parent=5 // pred_fallthru
        _
      %p345 = scmp.le.s32.totalorder 2, %s14
      // Predicated region
      $region49: #{tpu_custom_call.1} parent=5 // pred_check
        %p346 = pneg %p345
      $region50: #{tpu_custom_call.1} parent=5 // pred_check_branch
        %348 = sbr.rel (%p346) target = $region52
      $region51: #{tpu_custom_call.1} parent=5 // pred_region
        %s349 = ssub.s32 %s14, 2
        // Predicated region
        $region53: #{tpu_custom_call.1} parent=51 // pred_check
          %p350 = pneg %p111
        $region54: #{tpu_custom_call.1} parent=51 // pred_check_branch
          %352 = sbr.rel (%p350) target = $region56
        $region55: #{tpu_custom_call.1} parent=51 // pred_region
          %p353 = scmp.lt.s32.totalorder %s25, 1
          %s354 = scalar_select %p353, %s25, 1
          %s355 = smul.addr %s354, 8
          %s356 = scalar_lea.vmem %s2, %s355
        $region56: #{tpu_custom_call.1} parent=51 // pred_fallthru
          _
      $region52: #{tpu_custom_call.1} parent=5 // pred_fallthru
        _
    $region6: #{tpu_custom_call.1} parent=1 // loop_footer
      %s18 = sadd.s32 1, %s14
    $region7: #{tpu_custom_call.1} parent=1 // loop_footer_branch
      %13 = sbr.rel target = $region3
    $region8: #{tpu_custom_call.1} parent=1 // loop_exit
      _
    %357 = vsyncpa [#allocation5], 1
    %s358 = scalar_lea.sflag [#allocation5], 1
    %359 = vsyncpa %s358, 1
    %360 = vsyncpa [#allocation7], 1
    %s361 = scalar_lea.sflag [#allocation7], 1
    %362 = vsyncpa %s361, 1

</llo_original>
